<compile_context>
chip_gen: v6e
topology: v6e:2x2x1
jax: 0.10.0
libtpu: 0.0.40
codegen_flags: <defaults>
</compile_context>

<pallas_src>
import jax
import jax.numpy as jnp
from jax.experimental import pallas as pl
from jax.experimental.pallas import tpu as pltpu

STATE_DIM = 4
HIDDEN = 128


def critic_kernel(x_ref, w1_ref, b1_ref, w2_ref, b2_ref, w3_ref, b3_ref, o_ref):
    # x_ref : [4, TB]   f32   (feature-major: batch is the lane axis)
    # w1_ref: [128, 4]  f32,  b1_ref: [128, 1] f32
    # w2_ref: [128,128] bf16, b2_ref: [128, 1] f32
    # w3_ref: [128, 1]  f32,  b3_ref: [1, 1]   f32 (SMEM)
    # o_ref : [1, TB]   f32   (lane-dense output row)
    x = x_ref[...]
    w1 = w1_ref[...]

    # ---- Layer 1: Linear(4 -> 128) + ReLU on the VPU (K=4 is too shallow to
    # be worth an MXU push/pop): h1[j, b] = b1[j] + sum_k W1[j, k] * x[k, b].
    acc = b1_ref[...] + w1[:, 0:1] * x[0:1, :]
    acc = acc + w1[:, 1:2] * x[1:2, :]
    acc = acc + w1[:, 2:3] * x[2:3, :]
    acc = acc + w1[:, 3:4] * x[3:4, :]
    h1 = jnp.maximum(acc, 0.0)                               # [128, TB] f32

    # ---- Layer 2: Linear(128 -> 128) + ReLU. bf16 MXU matmul, f32 accum;
    # bias add + ReLU stay in f32 (v5e VPU has no bf16).
    h2 = jnp.dot(w2_ref[...], h1.astype(jnp.bfloat16),
                 preferred_element_type=jnp.float32)         # [128, TB] f32
    h2 = jnp.maximum(h2 + b2_ref[...], 0.0)

    # ---- Layer 3: Linear(128 -> 1) as VPU multiply + sublane reduce
    # (avoids an N=1 MXU matmul; result is already a lane-dense row).
    out = jnp.sum(h2 * w3_ref[...], axis=0, keepdims=True)   # [1, TB] f32
    o_ref[...] = (out + b3_ref[0, 0]).astype(o_ref.dtype)


def critic_forward(x, params, *, max_tile_b=512):
    """x: [B, STATE_DIM] f32 -> [B, 1] f32 (same semantics as the torch module)."""
    w1, b1, w2, b2, w3, b3 = params
    B = x.shape[0]

    # Batch tile: multiple of 128 (lane width), capped at max_tile_b.
    TB = min(max_tile_b, pl.cdiv(B, 128) * 128)
    num_tiles = pl.cdiv(B, TB)
    B_pad = num_tiles * TB

    # Feature-major, zero-padded batch (padding columns are sliced off below).
    xt = jnp.pad(x.T, ((0, 0), (0, B_pad - B)))              # [4, B_pad]

    flops = 2 * B_pad * (STATE_DIM * HIDDEN + HIDDEN * HIDDEN + HIDDEN)
    bytes_accessed = int(xt.nbytes) + sum(int(p.nbytes) for p in params) \
        + B_pad * 4

    out = pl.pallas_call(
        critic_kernel,
        out_shape=jax.ShapeDtypeStruct((1, B_pad), jnp.float32),
        grid=(num_tiles,),
        in_specs=[
            pl.BlockSpec((STATE_DIM, TB), lambda i: (0, i)),      # x tile
            pl.BlockSpec((HIDDEN, STATE_DIM), lambda i: (0, 0)),  # w1 (resident)
            pl.BlockSpec((HIDDEN, 1), lambda i: (0, 0)),          # b1
            pl.BlockSpec((HIDDEN, HIDDEN), lambda i: (0, 0)),     # w2 (resident)
            pl.BlockSpec((HIDDEN, 1), lambda i: (0, 0)),          # b2
            pl.BlockSpec((HIDDEN, 1), lambda i: (0, 0)),          # w3
            pl.BlockSpec(memory_space=pltpu.MemorySpace.SMEM),    # b3 scalar
        ],
        out_specs=pl.BlockSpec((1, TB), lambda i: (0, i)),
        compiler_params=pltpu.CompilerParams(
            # Independent batch tiles -> shard across v7x's 2 TensorCores.
            dimension_semantics=("parallel",),
        ),
        cost_estimate=pl.CostEstimate(
            flops=flops, transcendentals=0, bytes_accessed=bytes_accessed),
    )(xt, w1, b1, w2, b2, w3, b3)

    return out[0, :B][:, None]                                # [B, 1]


def init_params(key):
    # Deterministic synthetic init (shapes/init match the PyTorch module).
    k1, k2, k3, k4, k5, k6 = jax.random.split(key, 6)

    def uniform(k, shape, fan_in):
        bound = 1.0 / (float(fan_in) ** 0.5)
        return jax.random.uniform(k, shape, jnp.float32, -bound, bound)

    w1 = uniform(k1, (HIDDEN, STATE_DIM), STATE_DIM)          # torch W1
    b1 = uniform(k2, (HIDDEN, 1), STATE_DIM)                  # torch b1 (col)
    w2 = uniform(k3, (HIDDEN, HIDDEN), HIDDEN).astype(jnp.bfloat16)  # torch W2
    b2 = uniform(k4, (HIDDEN, 1), HIDDEN)                     # torch b2 (col)
    w3 = uniform(k5, (HIDDEN, 1), HIDDEN)                     # torch W3.T
    b3 = uniform(k6, (1, 1), HIDDEN)                          # torch b3
    return (w1, b1, w2, b2, w3, b3)


def critic_ref(x, params):
    # Pure-JAX reference with PyTorch Linear semantics (y = x @ W.T + b).
    w1, b1, w2, b2, w3, b3 = params
    h1 = jnp.maximum(x @ w1.T + b1[:, 0], 0.0)
    h2 = jnp.maximum(h1 @ w2.astype(jnp.float32).T + b2[:, 0], 0.0)
    return h2 @ w3 + b3[0, 0]


if __name__ == "__main__":
    key = jax.random.PRNGKey(0)
    kx, kx2, kp = jax.random.split(key, 3)
    params = init_params(kp)

    # Small-batch (RL inference) path: single tile, grid = 1.
    B = 8
    x = jax.random.normal(kx, (B, STATE_DIM), dtype=jnp.float32)
    out = jax.block_until_ready(critic_forward(x, params))
    ref = critic_ref(x, params)
    assert out.shape == (B, 1), out.shape
    assert jnp.allclose(out, ref, atol=2e-2, rtol=2e-2)

    # Larger batch exercising the tiled, pipelined path (grid > 1, padding).
    B2 = 1056
    x2 = jax.random.normal(kx2, (B2, STATE_DIM), dtype=jnp.float32)
    out2 = jax.block_until_ready(critic_forward(x2, params))
    ref2 = critic_ref(x2, params)
    assert out2.shape == (B2, 1), out2.shape
    assert jnp.allclose(out2, ref2, atol=2e-2, rtol=2e-2)

    print("KERNEL_OK")
</pallas_src>

<mosaic_0001>
module attributes {stable_mosaic.version = 11 : i64} {
  func.func @critic_kernel(%arg0: i32, %arg1: memref<4x128xf32, #tpu.memory_space<vmem>>, %arg2: memref<128x4xf32, #tpu.memory_space<vmem>>, %arg3: memref<128x1xf32, #tpu.memory_space<vmem>>, %arg4: memref<128x128xbf16, #tpu.memory_space<vmem>>, %arg5: memref<128x1xf32, #tpu.memory_space<vmem>>, %arg6: memref<128x1xf32, #tpu.memory_space<vmem>>, %arg7: memref<1x1xf32, #tpu.memory_space<smem>>, %arg8: memref<1x128xf32, #tpu.memory_space<vmem>>) attributes {dimension_semantics = [#tpu.dimension_semantics<parallel>], iteration_bounds = array<i64: 1>, scalar_prefetch = 0 : i64, scratch_operands = 0 : i64, tpu.core_type = #tpu.core_type<tc>, window_params = [{transform_indices = @transform_0, window_bounds = array<i64: 4, 128>}, {pipeline_mode = #tpu.pipeline_mode<synchronous>, transform_indices = @transform_1, window_bounds = array<i64: 128, 4>}, {pipeline_mode = #tpu.pipeline_mode<synchronous>, transform_indices = @transform_2, window_bounds = array<i64: 128, 1>}, {pipeline_mode = #tpu.pipeline_mode<synchronous>, transform_indices = @transform_3, window_bounds = array<i64: 128, 128>}, {pipeline_mode = #tpu.pipeline_mode<synchronous>, transform_indices = @transform_4, window_bounds = array<i64: 128, 1>}, {pipeline_mode = #tpu.pipeline_mode<synchronous>, transform_indices = @transform_5, window_bounds = array<i64: 128, 1>}, {transform_indices = @transform_6, window_bounds = array<i64: 1, 1>}, {transform_indices = @transform_7, window_bounds = array<i64: 1, 128>}]} {
    %c0 = arith.constant 0 : index
    %c0_0 = arith.constant 0 : index
    %0 = vector.load %arg1[%c0, %c0_0] : memref<4x128xf32, #tpu.memory_space<vmem>>, vector<4x128xf32>
    %c0_1 = arith.constant 0 : index
    %c0_2 = arith.constant 0 : index
    %1 = vector.load %arg2[%c0_1, %c0_2] : memref<128x4xf32, #tpu.memory_space<vmem>>, vector<128x4xf32>
    %c0_3 = arith.constant 0 : index
    %c0_4 = arith.constant 0 : index
    %2 = vector.load %arg3[%c0_3, %c0_4] : memref<128x1xf32, #tpu.memory_space<vmem>>, vector<128x1xf32>
    %3 = vector.extract_strided_slice %1 {offsets = [0, 0], sizes = [128, 1], strides = [1, 1]} : vector<128x4xf32> to vector<128x1xf32>
    %4 = vector.extract_strided_slice %0 {offsets = [0, 0], sizes = [1, 128], strides = [1, 1]} : vector<4x128xf32> to vector<1x128xf32>
    %5 = vector.broadcast %3 : vector<128x1xf32> to vector<128x128xf32>
    %6 = vector.broadcast %4 : vector<1x128xf32> to vector<128x128xf32>
    %7 = arith.mulf %5, %6 : vector<128x128xf32>
    %8 = vector.broadcast %2 : vector<128x1xf32> to vector<128x128xf32>
    %9 = arith.addf %8, %7 : vector<128x128xf32>
    %10 = vector.extract_strided_slice %1 {offsets = [0, 1], sizes = [128, 1], strides = [1, 1]} : vector<128x4xf32> to vector<128x1xf32>
    %11 = vector.extract_strided_slice %0 {offsets = [1, 0], sizes = [1, 128], strides = [1, 1]} : vector<4x128xf32> to vector<1x128xf32>
    %12 = vector.broadcast %10 : vector<128x1xf32> to vector<128x128xf32>
    %13 = vector.broadcast %11 : vector<1x128xf32> to vector<128x128xf32>
    %14 = arith.mulf %12, %13 : vector<128x128xf32>
    %15 = arith.addf %9, %14 : vector<128x128xf32>
    %16 = vector.extract_strided_slice %1 {offsets = [0, 2], sizes = [128, 1], strides = [1, 1]} : vector<128x4xf32> to vector<128x1xf32>
    %17 = vector.extract_strided_slice %0 {offsets = [2, 0], sizes = [1, 128], strides = [1, 1]} : vector<4x128xf32> to vector<1x128xf32>
    %18 = vector.broadcast %16 : vector<128x1xf32> to vector<128x128xf32>
    %19 = vector.broadcast %17 : vector<1x128xf32> to vector<128x128xf32>
    %20 = arith.mulf %18, %19 : vector<128x128xf32>
    %21 = arith.addf %15, %20 : vector<128x128xf32>
    %22 = vector.extract_strided_slice %1 {offsets = [0, 3], sizes = [128, 1], strides = [1, 1]} : vector<128x4xf32> to vector<128x1xf32>
    %23 = vector.extract_strided_slice %0 {offsets = [3, 0], sizes = [1, 128], strides = [1, 1]} : vector<4x128xf32> to vector<1x128xf32>
    %24 = vector.broadcast %22 : vector<128x1xf32> to vector<128x128xf32>
    %25 = vector.broadcast %23 : vector<1x128xf32> to vector<128x128xf32>
    %26 = arith.mulf %24, %25 : vector<128x128xf32>
    %27 = arith.addf %21, %26 : vector<128x128xf32>
    %cst = arith.constant 0.000000e+00 : f32
    %28 = vector.broadcast %cst : f32 to vector<128x128xf32>
    %29 = arith.maximumf %27, %28 : vector<128x128xf32>
    %c0_5 = arith.constant 0 : index
    %c0_6 = arith.constant 0 : index
    %30 = vector.load %arg4[%c0_5, %c0_6] : memref<128x128xbf16, #tpu.memory_space<vmem>>, vector<128x128xbf16>
    %31 = arith.truncf %29 : vector<128x128xf32> to vector<128x128xbf16>
    %cst_7 = arith.constant dense<0.000000e+00> : vector<128x128xf32>
    %32 = tpu.matmul %30, %31, %cst_7 {dimension_numbers = #tpu.dot_dimension_numbers<[1], [0], [0], [1], [0, 0, 1, 1], [], []>} : vector<128x128xbf16>, vector<128x128xbf16>, vector<128x128xf32> -> vector<128x128xf32>
    %c0_8 = arith.constant 0 : index
    %c0_9 = arith.constant 0 : index
    %33 = vector.load %arg5[%c0_8, %c0_9] : memref<128x1xf32, #tpu.memory_space<vmem>>, vector<128x1xf32>
    %34 = vector.broadcast %33 : vector<128x1xf32> to vector<128x128xf32>
    %35 = arith.addf %32, %34 : vector<128x128xf32>
    %cst_10 = arith.constant 0.000000e+00 : f32
    %36 = vector.broadcast %cst_10 : f32 to vector<128x128xf32>
    %37 = arith.maximumf %35, %36 : vector<128x128xf32>
    %c0_11 = arith.constant 0 : index
    %c0_12 = arith.constant 0 : index
    %38 = vector.load %arg6[%c0_11, %c0_12] : memref<128x1xf32, #tpu.memory_space<vmem>>, vector<128x1xf32>
    %39 = vector.broadcast %38 : vector<128x1xf32> to vector<128x128xf32>
    %40 = arith.mulf %37, %39 : vector<128x128xf32>
    %cst_13 = arith.constant dense<0.000000e+00> : vector<128xf32>
    %41 = vector.multi_reduction <add>, %40, %cst_13 [0] : vector<128x128xf32> to vector<128xf32>
    %42 = vector.shape_cast %41 : vector<128xf32> to vector<1x128xf32>
    %c0_14 = arith.constant 0 : index
    %c0_15 = arith.constant 0 : index
    %43 = memref.load %arg7[%c0_14, %c0_15] : memref<1x1xf32, #tpu.memory_space<smem>>
    %44 = vector.broadcast %43 : f32 to vector<1x128xf32>
    %45 = arith.addf %42, %44 : vector<1x128xf32>
    %c0_16 = arith.constant 0 : index
    %c0_17 = arith.constant 0 : index
    %46 = vector.load %arg8[%c0_16, %c0_17] : memref<1x128xf32, #tpu.memory_space<vmem>>, vector<1x128xf32>
    tpu.vector_store %arg8[%c0_16, %c0_17], %45 {strides = array<i32>} : memref<1x128xf32, #tpu.memory_space<vmem>>, vector<1x128xf32>,
    return
  }
  func.func @transform_0(%arg0: i32) -> (i32, i32) {
    %c0_i32 = arith.constant 0 : i32
    %c0_i32_0 = arith.constant 0 : i32
    return %c0_i32, %arg0 : i32, i32
  }
  func.func @transform_1(%arg0: i32) -> (i32, i32) {
    %c0_i32 = arith.constant 0 : i32
    %c0_i32_0 = arith.constant 0 : i32
    %c0_i32_1 = arith.constant 0 : i32
    return %c0_i32, %c0_i32_0 : i32, i32
  }
  func.func @transform_2(%arg0: i32) -> (i32, i32) {
    %c0_i32 = arith.constant 0 : i32
    %c0_i32_0 = arith.constant 0 : i32
    %c0_i32_1 = arith.constant 0 : i32
    return %c0_i32, %c0_i32_0 : i32, i32
  }
  func.func @transform_3(%arg0: i32) -> (i32, i32) {
    %c0_i32 = arith.constant 0 : i32
    %c0_i32_0 = arith.constant 0 : i32
    %c0_i32_1 = arith.constant 0 : i32
    return %c0_i32, %c0_i32_0 : i32, i32
  }
  func.func @transform_4(%arg0: i32) -> (i32, i32) {
    %c0_i32 = arith.constant 0 : i32
    %c0_i32_0 = arith.constant 0 : i32
    %c0_i32_1 = arith.constant 0 : i32
    return %c0_i32, %c0_i32_0 : i32, i32
  }
  func.func @transform_5(%arg0: i32) -> (i32, i32) {
    %c0_i32 = arith.constant 0 : i32
    %c0_i32_0 = arith.constant 0 : i32
    %c0_i32_1 = arith.constant 0 : i32
    return %c0_i32, %c0_i32_0 : i32, i32
  }
  func.func @transform_6(%arg0: i32) -> (i32, i32) {
    %c0_i32 = arith.constant 0 : i32
    %c0_i32_0 = arith.constant 0 : i32
    %c0_i32_1 = arith.constant 0 : i32
    return %c0_i32, %c0_i32_0 : i32, i32
  }
  func.func @transform_7(%arg0: i32) -> (i32, i32) {
    %c0_i32 = arith.constant 0 : i32
    %c0_i32_0 = arith.constant 0 : i32
    return %c0_i32, %arg0 : i32, i32
  }
}

</mosaic_0001>

<llo_original>
// kernel: tpu_custom_call.1
$region0: #{tpu_custom_call.1}
  #allocation0 [shape = 'u32[]', space=smem, size = 0x4, offset = 0x4, fixed_abs, tag = 'smem constant byte address 0x4 - core index']
  #allocation1 [shape = 'u32[144,128]{1,0:T(1,128)}', space=vmem, size = 0x12000, scoped, tag = 'internal scratch']
  #allocation2 [shape = 'f32[1,1]{1,0:T(1,128)S(6)}', space=smem, size = 0x200, scoped, tag = 'scoped memory for tpu_custom_call.1']
  %s0 = inlined_call_operand.vmem [shape: f32[4,128], index: 0, kind: input, shape index: {}]
  %s1 = inlined_call_operand.vmem [shape: f32[128,4], index: 1, kind: input, shape index: {}]
  %s2 = inlined_call_operand.vmem [shape: f32[128,1], index: 2, kind: input, shape index: {}]
  %s3 = inlined_call_operand.vmem [shape: bf16[128,128], index: 3, kind: input, shape index: {}]
  %s4 = inlined_call_operand.vmem [shape: f32[128,1], index: 4, kind: input, shape index: {}]
  %s5 = inlined_call_operand.vmem [shape: f32[128,1], index: 5, kind: input, shape index: {}]
  %s6 = inlined_call_operand.<no memory space> [shape: f32[1,1], index: 6, kind: input, shape index: {}]
  %s7 = inlined_call_operand.hbm [shape: f32[1,128], index: 7, kind: output, shape index: {}]
  %s8 = sld [smem:[#allocation0]]
  $region38: #{tpu_custom_call.1} parent=0
    _
  %s10 = ssub.s32 1, %s8
  %s11 = scalar_select 0, %s10, %s8
  %12 = sst [smem:[#allocation2]] %s6
  $region1: #{tpu_custom_call.1} parent=0
    #allocation3 [shape = 'u8[512]{0}', space=vmem, size = 0x400, scoped, tag = 'output window, operand 0, single buffered']
    #allocation4 [shape = 's32[1]{0}', space=sflag, size = 0x4, scoped, tag = 'scoped memory for tpu_custom_call.1']
    %13 = vsyncpa [#allocation4], 0
    // Predicated region
    $region2: #{tpu_custom_call.1} parent=1 // pred_check
      _
    $region3: #{tpu_custom_call.1} parent=1 // pred_check_branch
      %15 = sbr.rel (0) target = $region5
    $region4: #{tpu_custom_call.1} parent=1 // pred_region
      _
    $region5: #{tpu_custom_call.1} parent=1 // pred_fallthru
      _
    // Predicated region
    $region6: #{tpu_custom_call.1} parent=1 // pred_check
      _
    $region7: #{tpu_custom_call.1} parent=1 // pred_check_branch
      %17 = sbr.rel (0) target = $region9
    $region8: #{tpu_custom_call.1} parent=1 // pred_region
      _
    $region9: #{tpu_custom_call.1} parent=1 // pred_fallthru
      _
    // Predicated region
    $region10: #{tpu_custom_call.1} parent=1 // pred_check
      _
    $region11: #{tpu_custom_call.1} parent=1 // pred_check_branch
      %19 = sbr.rel (0) target = $region13
    $region12: #{tpu_custom_call.1} parent=1 // pred_region
      _
    $region13: #{tpu_custom_call.1} parent=1 // pred_fallthru
      _
    // Predicated region
    $region14: #{tpu_custom_call.1} parent=1 // pred_check
      _
    $region15: #{tpu_custom_call.1} parent=1 // pred_check_branch
      %21 = sbr.rel (0) target = $region17
    $region16: #{tpu_custom_call.1} parent=1 // pred_region
      _
    $region17: #{tpu_custom_call.1} parent=1 // pred_fallthru
      _
    // Predicated region
    $region18: #{tpu_custom_call.1} parent=1 // pred_check
      _
    $region19: #{tpu_custom_call.1} parent=1 // pred_check_branch
      %23 = sbr.rel (0) target = $region21
    $region20: #{tpu_custom_call.1} parent=1 // pred_region
      _
    $region21: #{tpu_custom_call.1} parent=1 // pred_fallthru
      _
    // Predicated region
    $region22: #{tpu_custom_call.1} parent=1 // pred_check
      _
    $region23: #{tpu_custom_call.1} parent=1 // pred_check_branch
      %25 = sbr.rel (0) target = $region25
    $region24: #{tpu_custom_call.1} parent=1 // pred_region
      _
    $region25: #{tpu_custom_call.1} parent=1 // pred_fallthru
      _
    // Predicated region
    $region26: #{tpu_custom_call.1} parent=1 // pred_check
      _
    $region27: #{tpu_custom_call.1} parent=1 // pred_check_branch
      %27 = sbr.rel (0) target = $region29
    $region28: #{tpu_custom_call.1} parent=1 // pred_region
      _
    $region29: #{tpu_custom_call.1} parent=1 // pred_fallthru
      _
    %v29 = vld [vmem:[%s0] sm:$0xf]
    %v30 = vld [vmem:[%s1] sm:$0xff]
    %v31 = vld [vmem:[%s1 + $0x8] sm:$0xff]
    %v32 = vld [vmem:[%s1 + $0x10] sm:$0xff]
    %v33 = vld [vmem:[%s1 + $0x18] sm:$0xff]
    %v34 = vld [vmem:[%s1 + $0x20] sm:$0xff]
    %v35 = vld [vmem:[%s1 + $0x28] sm:$0xff]
    %v36 = vld [vmem:[%s1 + $0x30] sm:$0xff]
    %v37 = vld [vmem:[%s1 + $0x38] sm:$0xff]
    %v38 = vld [vmem:[%s1 + $0x40] sm:$0xff]
    %v39 = vld [vmem:[%s1 + $0x48] sm:$0xff]
    %v40 = vld [vmem:[%s1 + $0x50] sm:$0xff]
    %v41 = vld [vmem:[%s1 + $0x58] sm:$0xff]
    %v42 = vld [vmem:[%s1 + $0x60] sm:$0xff]
    %v43 = vld [vmem:[%s1 + $0x68] sm:$0xff]
    %v44 = vld [vmem:[%s1 + $0x70] sm:$0xff]
    %v45 = vld [vmem:[%s1 + $0x78] sm:$0xff]
    %v46 = vld [vmem:[%s2] sm:$0xff]
    %v47 = vld [vmem:[%s2 + $0x8] sm:$0xff]
    %v48 = vld [vmem:[%s2 + $0x10] sm:$0xff]
    %v49 = vld [vmem:[%s2 + $0x18] sm:$0xff]
    %v50 = vld [vmem:[%s2 + $0x20] sm:$0xff]
    %v51 = vld [vmem:[%s2 + $0x28] sm:$0xff]
    %v52 = vld [vmem:[%s2 + $0x30] sm:$0xff]
    %v53 = vld [vmem:[%s2 + $0x38] sm:$0xff]
    %v54 = vld [vmem:[%s2 + $0x40] sm:$0xff]
    %v55 = vld [vmem:[%s2 + $0x48] sm:$0xff]
    %v56 = vld [vmem:[%s2 + $0x50] sm:$0xff]
    %v57 = vld [vmem:[%s2 + $0x58] sm:$0xff]
    %v58 = vld [vmem:[%s2 + $0x60] sm:$0xff]
    %v59 = vld [vmem:[%s2 + $0x68] sm:$0xff]
    %v60 = vld [vmem:[%s2 + $0x70] sm:$0xff]
    %v61 = vld [vmem:[%s2 + $0x78] sm:$0xff]
    %63 = vset.pattern.permute.xlu0 0
    %64 = vperm.xlu0 %63, %v30
    %v65 = vpop.permute.xlu0 %64
    %68 = vset.pattern.permute.xlu0 0
    %69 = vperm.xlu0 %68, %v31
    %v70 = vpop.permute.xlu0 %69
    %73 = vset.pattern.permute.xlu0 0
    %74 = vperm.xlu0 %73, %v32
    %v75 = vpop.permute.xlu0 %74
    %78 = vset.pattern.permute.xlu0 0
    %79 = vperm.xlu0 %78, %v33
    %v80 = vpop.permute.xlu0 %79
    %83 = vset.pattern.permute.xlu0 0
    %84 = vperm.xlu0 %83, %v34
    %v85 = vpop.permute.xlu0 %84
    %88 = vset.pattern.permute.xlu0 0
    %89 = vperm.xlu0 %88, %v35
    %v90 = vpop.permute.xlu0 %89
    %93 = vset.pattern.permute.xlu0 0
    %94 = vperm.xlu0 %93, %v36
    %v95 = vpop.permute.xlu0 %94
    %98 = vset.pattern.permute.xlu0 0
    %99 = vperm.xlu0 %98, %v37
    %v100 = vpop.permute.xlu0 %99
    %103 = vset.pattern.permute.xlu0 0
    %104 = vperm.xlu0 %103, %v38
    %v105 = vpop.permute.xlu0 %104
    %108 = vset.pattern.permute.xlu0 0
    %109 = vperm.xlu0 %108, %v39
    %v110 = vpop.permute.xlu0 %109
    %113 = vset.pattern.permute.xlu0 0
    %114 = vperm.xlu0 %113, %v40
    %v115 = vpop.permute.xlu0 %114
    %118 = vset.pattern.permute.xlu0 0
    %119 = vperm.xlu0 %118, %v41
    %v120 = vpop.permute.xlu0 %119
    %123 = vset.pattern.permute.xlu0 0
    %124 = vperm.xlu0 %123, %v42
    %v125 = vpop.permute.xlu0 %124
    %128 = vset.pattern.permute.xlu0 0
    %129 = vperm.xlu0 %128, %v43
    %v130 = vpop.permute.xlu0 %129
    %133 = vset.pattern.permute.xlu0 0
    %134 = vperm.xlu0 %133, %v44
    %v135 = vpop.permute.xlu0 %134
    %138 = vset.pattern.permute.xlu0 0
    %139 = vperm.xlu0 %138, %v45
    %v140 = vpop.permute.xlu0 %139
    %v142 = vlaneseq
    %v143 = vshrl.u32 %v142, 7
    %v144 = vsub.s32 0, %v143
    %v145 = vrot.slane %v29, %v144
    %v146 = vmul.f32 %v65, %v145
    %v147 = vmul.f32 %v70, %v145
    %v148 = vmul.f32 %v75, %v145
    %v149 = vmul.f32 %v80, %v145
    %v150 = vmul.f32 %v85, %v145
    %v151 = vmul.f32 %v90, %v145
    %v152 = vmul.f32 %v95, %v145
    %v153 = vmul.f32 %v100, %v145
    %v154 = vmul.f32 %v105, %v145
    %v155 = vmul.f32 %v110, %v145
    %v156 = vmul.f32 %v115, %v145
    %v157 = vmul.f32 %v120, %v145
    %v158 = vmul.f32 %v125, %v145
    %v159 = vmul.f32 %v130, %v145
    %v160 = vmul.f32 %v135, %v145
    %v161 = vmul.f32 %v140, %v145
    %163 = vset.pattern.permute.xlu0 0
    %164 = vperm.xlu0 %163, %v46
    %v165 = vpop.permute.xlu0 %164
    %168 = vset.pattern.permute.xlu0 0
    %169 = vperm.xlu0 %168, %v47
    %v170 = vpop.permute.xlu0 %169
    %173 = vset.pattern.permute.xlu0 0
    %174 = vperm.xlu0 %173, %v48
    %v175 = vpop.permute.xlu0 %174
    %178 = vset.pattern.permute.xlu0 0
    %179 = vperm.xlu0 %178, %v49
    %v180 = vpop.permute.xlu0 %179
    %183 = vset.pattern.permute.xlu0 0
    %184 = vperm.xlu0 %183, %v50
    %v185 = vpop.permute.xlu0 %184
    %188 = vset.pattern.permute.xlu0 0
    %189 = vperm.xlu0 %188, %v51
    %v190 = vpop.permute.xlu0 %189
    %193 = vset.pattern.permute.xlu0 0
    %194 = vperm.xlu0 %193, %v52
    %v195 = vpop.permute.xlu0 %194
    %198 = vset.pattern.permute.xlu0 0
    %199 = vperm.xlu0 %198, %v53
    %v200 = vpop.permute.xlu0 %199
    %203 = vset.pattern.permute.xlu0 0
    %204 = vperm.xlu0 %203, %v54
    %v205 = vpop.permute.xlu0 %204
    %208 = vset.pattern.permute.xlu0 0
    %209 = vperm.xlu0 %208, %v55
    %v210 = vpop.permute.xlu0 %209
    %213 = vset.pattern.permute.xlu0 0
    %214 = vperm.xlu0 %213, %v56
    %v215 = vpop.permute.xlu0 %214
    %218 = vset.pattern.permute.xlu0 0
    %219 = vperm.xlu0 %218, %v57
    %v220 = vpop.permute.xlu0 %219
    %223 = vset.pattern.permute.xlu0 0
    %224 = vperm.xlu0 %223, %v58
    %v225 = vpop.permute.xlu0 %224
    %228 = vset.pattern.permute.xlu0 0
    %229 = vperm.xlu0 %228, %v59
    %v230 = vpop.permute.xlu0 %229
    %233 = vset.pattern.permute.xlu0 0
    %234 = vperm.xlu0 %233, %v60
    %v235 = vpop.permute.xlu0 %234
    %238 = vset.pattern.permute.xlu0 0
    %239 = vperm.xlu0 %238, %v61
    %v240 = vpop.permute.xlu0 %239
    %v242 = vadd.f32 %v165, %v146
    %v243 = vadd.f32 %v170, %v147
    %v244 = vadd.f32 %v175, %v148
    %v245 = vadd.f32 %v180, %v149
    %v246 = vadd.f32 %v185, %v150
    %v247 = vadd.f32 %v190, %v151
    %v248 = vadd.f32 %v195, %v152
    %v249 = vadd.f32 %v200, %v153
    %v250 = vadd.f32 %v205, %v154
    %v251 = vadd.f32 %v210, %v155
    %v252 = vadd.f32 %v215, %v156
    %v253 = vadd.f32 %v220, %v157
    %v254 = vadd.f32 %v225, %v158
    %v255 = vadd.f32 %v230, %v159
    %v256 = vadd.f32 %v235, %v160
    %v257 = vadd.f32 %v240, %v161
    %258 = vset.pattern.permute.xlu0 1
    %259 = vperm.xlu0 %258, %v30
    %v260 = vpop.permute.xlu0 %259
    %262 = vset.pattern.permute.xlu0 1
    %263 = vperm.xlu0 %262, %v31
    %v264 = vpop.permute.xlu0 %263
    %266 = vset.pattern.permute.xlu0 1
    %267 = vperm.xlu0 %266, %v32
    %v268 = vpop.permute.xlu0 %267
    %270 = vset.pattern.permute.xlu0 1
    %271 = vperm.xlu0 %270, %v33
    %v272 = vpop.permute.xlu0 %271
    %274 = vset.pattern.permute.xlu0 1
    %275 = vperm.xlu0 %274, %v34
    %v276 = vpop.permute.xlu0 %275
    %278 = vset.pattern.permute.xlu0 1
    %279 = vperm.xlu0 %278, %v35
    %v280 = vpop.permute.xlu0 %279
    %282 = vset.pattern.permute.xlu0 1
    %283 = vperm.xlu0 %282, %v36
    %v284 = vpop.permute.xlu0 %283
    %286 = vset.pattern.permute.xlu0 1
    %287 = vperm.xlu0 %286, %v37
    %v288 = vpop.permute.xlu0 %287
    %290 = vset.pattern.permute.xlu0 1
    %291 = vperm.xlu0 %290, %v38
    %v292 = vpop.permute.xlu0 %291
    %294 = vset.pattern.permute.xlu0 1
    %295 = vperm.xlu0 %294, %v39
    %v296 = vpop.permute.xlu0 %295
    %298 = vset.pattern.permute.xlu0 1
    %299 = vperm.xlu0 %298, %v40
    %v300 = vpop.permute.xlu0 %299
    %302 = vset.pattern.permute.xlu0 1
    %303 = vperm.xlu0 %302, %v41
    %v304 = vpop.permute.xlu0 %303
    %306 = vset.pattern.permute.xlu0 1
    %307 = vperm.xlu0 %306, %v42
    %v308 = vpop.permute.xlu0 %307
    %310 = vset.pattern.permute.xlu0 1
    %311 = vperm.xlu0 %310, %v43
    %v312 = vpop.permute.xlu0 %311
    %314 = vset.pattern.permute.xlu0 1
    %315 = vperm.xlu0 %314, %v44
    %v316 = vpop.permute.xlu0 %315
    %318 = vset.pattern.permute.xlu0 1
    %319 = vperm.xlu0 %318, %v45
    %v320 = vpop.permute.xlu0 %319
    %v322 = vlaneseq
    %v323 = vshrl.u32 %v322, 7
    %v324 = vsub.s32 1, %v323
    %v325 = vrot.slane %v29, %v324
    %v326 = vmul.f32 %v260, %v325
    %v327 = vmul.f32 %v264, %v325
    %v328 = vmul.f32 %v268, %v325
    %v329 = vmul.f32 %v272, %v325
    %v330 = vmul.f32 %v276, %v325
    %v331 = vmul.f32 %v280, %v325
    %v332 = vmul.f32 %v284, %v325
    %v333 = vmul.f32 %v288, %v325
    %v334 = vmul.f32 %v292, %v325
    %v335 = vmul.f32 %v296, %v325
    %v336 = vmul.f32 %v300, %v325
    %v337 = vmul.f32 %v304, %v325
    %v338 = vmul.f32 %v308, %v325
    %v339 = vmul.f32 %v312, %v325
    %v340 = vmul.f32 %v316, %v325
    %v341 = vmul.f32 %v320, %v325
    %v342 = vadd.f32 %v242, %v326
    %v343 = vadd.f32 %v243, %v327
    %v344 = vadd.f32 %v244, %v328
    %v345 = vadd.f32 %v245, %v329
    %v346 = vadd.f32 %v246, %v330
    %v347 = vadd.f32 %v247, %v331
    %v348 = vadd.f32 %v248, %v332
    %v349 = vadd.f32 %v249, %v333
    %v350 = vadd.f32 %v250, %v334
    %v351 = vadd.f32 %v251, %v335
    %v352 = vadd.f32 %v252, %v336
    %v353 = vadd.f32 %v253, %v337
    %v354 = vadd.f32 %v254, %v338
    %v355 = vadd.f32 %v255, %v339
    %v356 = vadd.f32 %v256, %v340
    %v357 = vadd.f32 %v257, %v341
    %358 = vset.pattern.permute.xlu0 2
    %359 = vperm.xlu0 %358, %v30
    %v360 = vpop.permute.xlu0 %359
    %362 = vset.pattern.permute.xlu0 2
    %363 = vperm.xlu0 %362, %v31
    %v364 = vpop.permute.xlu0 %363
    %366 = vset.pattern.permute.xlu0 2
    %367 = vperm.xlu0 %366, %v32
    %v368 = vpop.permute.xlu0 %367
    %370 = vset.pattern.permute.xlu0 2
    %371 = vperm.xlu0 %370, %v33
    %v372 = vpop.permute.xlu0 %371
    %374 = vset.pattern.permute.xlu0 2
    %375 = vperm.xlu0 %374, %v34
    %v376 = vpop.permute.xlu0 %375
    %378 = vset.pattern.permute.xlu0 2
    %379 = vperm.xlu0 %378, %v35
    %v380 = vpop.permute.xlu0 %379
    %382 = vset.pattern.permute.xlu0 2
    %383 = vperm.xlu0 %382, %v36
    %v384 = vpop.permute.xlu0 %383
    %386 = vset.pattern.permute.xlu0 2
    %387 = vperm.xlu0 %386, %v37
    %v388 = vpop.permute.xlu0 %387
    %390 = vset.pattern.permute.xlu0 2
    %391 = vperm.xlu0 %390, %v38
    %v392 = vpop.permute.xlu0 %391
    %394 = vset.pattern.permute.xlu0 2
    %395 = vperm.xlu0 %394, %v39
    %v396 = vpop.permute.xlu0 %395
    %398 = vset.pattern.permute.xlu0 2
    %399 = vperm.xlu0 %398, %v40
    %v400 = vpop.permute.xlu0 %399
    %402 = vset.pattern.permute.xlu0 2
    %403 = vperm.xlu0 %402, %v41
    %v404 = vpop.permute.xlu0 %403
    %406 = vset.pattern.permute.xlu0 2
    %407 = vperm.xlu0 %406, %v42
    %v408 = vpop.permute.xlu0 %407
    %410 = vset.pattern.permute.xlu0 2
    %411 = vperm.xlu0 %410, %v43
    %v412 = vpop.permute.xlu0 %411
    %414 = vset.pattern.permute.xlu0 2
    %415 = vperm.xlu0 %414, %v44
    %v416 = vpop.permute.xlu0 %415
    %418 = vset.pattern.permute.xlu0 2
    %419 = vperm.xlu0 %418, %v45
    %v420 = vpop.permute.xlu0 %419
    %v422 = vlaneseq
    %v423 = vshrl.u32 %v422, 7
    %v424 = vsub.s32 2, %v423
    %v425 = vrot.slane %v29, %v424
    %v426 = vmul.f32 %v360, %v425
    %v427 = vmul.f32 %v364, %v425
    %v428 = vmul.f32 %v368, %v425
    %v429 = vmul.f32 %v372, %v425
    %v430 = vmul.f32 %v376, %v425
    %v431 = vmul.f32 %v380, %v425
    %v432 = vmul.f32 %v384, %v425
    %v433 = vmul.f32 %v388, %v425
    %v434 = vmul.f32 %v392, %v425
    %v435 = vmul.f32 %v396, %v425
    %v436 = vmul.f32 %v400, %v425
    %v437 = vmul.f32 %v404, %v425
    %v438 = vmul.f32 %v408, %v425
    %v439 = vmul.f32 %v412, %v425
    %v440 = vmul.f32 %v416, %v425
    %v441 = vmul.f32 %v420, %v425
    %v442 = vadd.f32 %v342, %v426
    %v443 = vadd.f32 %v343, %v427
    %v444 = vadd.f32 %v344, %v428
    %v445 = vadd.f32 %v345, %v429
    %v446 = vadd.f32 %v346, %v430
    %v447 = vadd.f32 %v347, %v431
    %v448 = vadd.f32 %v348, %v432
    %v449 = vadd.f32 %v349, %v433
    %v450 = vadd.f32 %v350, %v434
    %v451 = vadd.f32 %v351, %v435
    %v452 = vadd.f32 %v352, %v436
    %v453 = vadd.f32 %v353, %v437
    %v454 = vadd.f32 %v354, %v438
    %v455 = vadd.f32 %v355, %v439
    %v456 = vadd.f32 %v356, %v440
    %v457 = vadd.f32 %v357, %v441
    %458 = vset.pattern.permute.xlu0 3
    %459 = vperm.xlu0 %458, %v30
    %v460 = vpop.permute.xlu0 %459
    %462 = vset.pattern.permute.xlu0 3
    %463 = vperm.xlu0 %462, %v31
    %v464 = vpop.permute.xlu0 %463
    %466 = vset.pattern.permute.xlu0 3
    %467 = vperm.xlu0 %466, %v32
    %v468 = vpop.permute.xlu0 %467
    %470 = vset.pattern.permute.xlu0 3
    %471 = vperm.xlu0 %470, %v33
    %v472 = vpop.permute.xlu0 %471
    %474 = vset.pattern.permute.xlu0 3
    %475 = vperm.xlu0 %474, %v34
    %v476 = vpop.permute.xlu0 %475
    %478 = vset.pattern.permute.xlu0 3
    %479 = vperm.xlu0 %478, %v35
    %v480 = vpop.permute.xlu0 %479
    %482 = vset.pattern.permute.xlu0 3
    %483 = vperm.xlu0 %482, %v36
    %v484 = vpop.permute.xlu0 %483
    %486 = vset.pattern.permute.xlu0 3
    %487 = vperm.xlu0 %486, %v37
    %v488 = vpop.permute.xlu0 %487
    %490 = vset.pattern.permute.xlu0 3
    %491 = vperm.xlu0 %490, %v38
    %v492 = vpop.permute.xlu0 %491
    %494 = vset.pattern.permute.xlu0 3
    %495 = vperm.xlu0 %494, %v39
    %v496 = vpop.permute.xlu0 %495
    %498 = vset.pattern.permute.xlu0 3
    %499 = vperm.xlu0 %498, %v40
    %v500 = vpop.permute.xlu0 %499
    %502 = vset.pattern.permute.xlu0 3
    %503 = vperm.xlu0 %502, %v41
    %v504 = vpop.permute.xlu0 %503
    %506 = vset.pattern.permute.xlu0 3
    %507 = vperm.xlu0 %506, %v42
    %v508 = vpop.permute.xlu0 %507
    %510 = vset.pattern.permute.xlu0 3
    %511 = vperm.xlu0 %510, %v43
    %v512 = vpop.permute.xlu0 %511
    %514 = vset.pattern.permute.xlu0 3
    %515 = vperm.xlu0 %514, %v44
    %v516 = vpop.permute.xlu0 %515
    %518 = vset.pattern.permute.xlu0 3
    %519 = vperm.xlu0 %518, %v45
    %v520 = vpop.permute.xlu0 %519
    %v522 = vlaneseq
    %v523 = vshrl.u32 %v522, 7
    %v524 = vsub.s32 3, %v523
    %v525 = vrot.slane %v29, %v524
    %v526 = vmul.f32 %v460, %v525
    %v527 = vmul.f32 %v464, %v525
    %v528 = vmul.f32 %v468, %v525
    %v529 = vmul.f32 %v472, %v525
    %v530 = vmul.f32 %v476, %v525
    %v531 = vmul.f32 %v480, %v525
    %v532 = vmul.f32 %v484, %v525
    %v533 = vmul.f32 %v488, %v525
    %v534 = vmul.f32 %v492, %v525
    %v535 = vmul.f32 %v496, %v525
    %v536 = vmul.f32 %v500, %v525
    %v537 = vmul.f32 %v504, %v525
    %v538 = vmul.f32 %v508, %v525
    %v539 = vmul.f32 %v512, %v525
    %v540 = vmul.f32 %v516, %v525
    %v541 = vmul.f32 %v520, %v525
    %v542 = vadd.f32 %v442, %v526
    %v543 = vadd.f32 %v443, %v527
    %v544 = vadd.f32 %v444, %v528
    %v545 = vadd.f32 %v445, %v529
    %v546 = vadd.f32 %v446, %v530
    %v547 = vadd.f32 %v447, %v531
    %v548 = vadd.f32 %v448, %v532
    %v549 = vadd.f32 %v449, %v533
    %v550 = vadd.f32 %v450, %v534
    %v551 = vadd.f32 %v451, %v535
    %v552 = vadd.f32 %v452, %v536
    %v553 = vadd.f32 %v453, %v537
    %v554 = vadd.f32 %v454, %v538
    %v555 = vadd.f32 %v455, %v539
    %v556 = vadd.f32 %v456, %v540
    %v557 = vadd.f32 %v457, %v541
    %v558 = vmax.f32 %v542, 0.0
    %v559 = vmax.f32 %v543, 0.0
    %v560 = vmax.f32 %v544, 0.0
    %v561 = vmax.f32 %v545, 0.0
    %v562 = vmax.f32 %v546, 0.0
    %v563 = vmax.f32 %v547, 0.0
    %v564 = vmax.f32 %v548, 0.0
    %v565 = vmax.f32 %v549, 0.0
    %v566 = vmax.f32 %v550, 0.0
    %v567 = vmax.f32 %v551, 0.0
    %v568 = vmax.f32 %v552, 0.0
    %v569 = vmax.f32 %v553, 0.0
    %v570 = vmax.f32 %v554, 0.0
    %v571 = vmax.f32 %v555, 0.0
    %v572 = vmax.f32 %v556, 0.0
    %v573 = vmax.f32 %v557, 0.0
    %v574 = vld [vmem:[%s3] sm:$0xf]
    %v575 = vld [vmem:[%s3 + $0x4] sm:$0xf]
    %v576 = vld [vmem:[%s3 + $0x8] sm:$0xf]
    %v577 = vld [vmem:[%s3 + $0xc] sm:$0xf]
    %v578 = vld [vmem:[%s3 + $0x10] sm:$0xf]
    %v579 = vld [vmem:[%s3 + $0x14] sm:$0xf]
    %v580 = vld [vmem:[%s3 + $0x18] sm:$0xf]
    %v581 = vld [vmem:[%s3 + $0x1c] sm:$0xf]
    %v582 = vld [vmem:[%s3 + $0x20] sm:$0xf]
    %v583 = vld [vmem:[%s3 + $0x24] sm:$0xf]
    %v584 = vld [vmem:[%s3 + $0x28] sm:$0xf]
    %v585 = vld [vmem:[%s3 + $0x2c] sm:$0xf]
    %v586 = vld [vmem:[%s3 + $0x30] sm:$0xf]
    %v587 = vld [vmem:[%s3 + $0x34] sm:$0xf]
    %v588 = vld [vmem:[%s3 + $0x38] sm:$0xf]
    %v589 = vld [vmem:[%s3 + $0x3c] sm:$0xf]
    %v590 = vpack.c.bf16 %v559, %v558
    %v591 = vpack.c.bf16 %v561, %v560
    %v592 = vpack.c.bf16 %v563, %v562
    %v593 = vpack.c.bf16 %v565, %v564
    %v594 = vpack.c.bf16 %v567, %v566
    %v595 = vpack.c.bf16 %v569, %v568
    %v596 = vpack.c.bf16 %v571, %v570
    %v597 = vpack.c.bf16 %v573, %v572
    %v598 = vld [vmem:[%s4] sm:$0xff]
    %v599 = vld [vmem:[%s4 + $0x8] sm:$0xff]
    %v600 = vld [vmem:[%s4 + $0x10] sm:$0xff]
    %v601 = vld [vmem:[%s4 + $0x18] sm:$0xff]
    %v602 = vld [vmem:[%s4 + $0x20] sm:$0xff]
    %v603 = vld [vmem:[%s4 + $0x28] sm:$0xff]
    %v604 = vld [vmem:[%s4 + $0x30] sm:$0xff]
    %v605 = vld [vmem:[%s4 + $0x38] sm:$0xff]
    %v606 = vld [vmem:[%s4 + $0x40] sm:$0xff]
    %v607 = vld [vmem:[%s4 + $0x48] sm:$0xff]
    %v608 = vld [vmem:[%s4 + $0x50] sm:$0xff]
    %v609 = vld [vmem:[%s4 + $0x58] sm:$0xff]
    %v610 = vld [vmem:[%s4 + $0x60] sm:$0xff]
    %v611 = vld [vmem:[%s4 + $0x68] sm:$0xff]
    %v612 = vld [vmem:[%s4 + $0x70] sm:$0xff]
    %v613 = vld [vmem:[%s4 + $0x78] sm:$0xff]
    %615 = vset.pattern.permute.xlu0 0
    %616 = vperm.xlu0 %615, %v598
    %v617 = vpop.permute.xlu0 %616
    %620 = vset.pattern.permute.xlu0 0
    %621 = vperm.xlu0 %620, %v599
    %v622 = vpop.permute.xlu0 %621
    %625 = vset.pattern.permute.xlu0 0
    %626 = vperm.xlu0 %625, %v600
    %v627 = vpop.permute.xlu0 %626
    %630 = vset.pattern.permute.xlu0 0
    %631 = vperm.xlu0 %630, %v601
    %v632 = vpop.permute.xlu0 %631
    %635 = vset.pattern.permute.xlu0 0
    %636 = vperm.xlu0 %635, %v602
    %v637 = vpop.permute.xlu0 %636
    %640 = vset.pattern.permute.xlu0 0
    %641 = vperm.xlu0 %640, %v603
    %v642 = vpop.permute.xlu0 %641
    %645 = vset.pattern.permute.xlu0 0
    %646 = vperm.xlu0 %645, %v604
    %v647 = vpop.permute.xlu0 %646
    %650 = vset.pattern.permute.xlu0 0
    %651 = vperm.xlu0 %650, %v605
    %v652 = vpop.permute.xlu0 %651
    %655 = vset.pattern.permute.xlu0 0
    %656 = vperm.xlu0 %655, %v606
    %v657 = vpop.permute.xlu0 %656
    %660 = vset.pattern.permute.xlu0 0
    %661 = vperm.xlu0 %660, %v607
    %v662 = vpop.permute.xlu0 %661
    %665 = vset.pattern.permute.xlu0 0
    %666 = vperm.xlu0 %665, %v608
    %v667 = vpop.permute.xlu0 %666
    %670 = vset.pattern.permute.xlu0 0
    %671 = vperm.xlu0 %670, %v609
    %v672 = vpop.permute.xlu0 %671
    %675 = vset.pattern.permute.xlu0 0
    %676 = vperm.xlu0 %675, %v610
    %v677 = vpop.permute.xlu0 %676
    %680 = vset.pattern.permute.xlu0 0
    %681 = vperm.xlu0 %680, %v611
    %v682 = vpop.permute.xlu0 %681
    %685 = vset.pattern.permute.xlu0 0
    %686 = vperm.xlu0 %685, %v612
    %v687 = vpop.permute.xlu0 %686
    %690 = vset.pattern.permute.xlu0 0
    %691 = vperm.xlu0 %690, %v613
    %v692 = vpop.permute.xlu0 %691
    %v710 = vunpack.c.l.b16 %v574
    %v711 = vunpack.c.l.b16 %v575
    %v712 = vunpack.c.l.b16 %v576
    %v713 = vunpack.c.l.b16 %v577
    %v714 = vunpack.c.l.b16 %v578
    %v715 = vunpack.c.l.b16 %v579
    %v716 = vunpack.c.l.b16 %v580
    %v717 = vunpack.c.l.b16 %v581
    %v718 = vunpack.c.l.b16 %v582
    %v719 = vunpack.c.l.b16 %v583
    %v720 = vunpack.c.l.b16 %v584
    %v721 = vunpack.c.l.b16 %v585
    %v722 = vunpack.c.l.b16 %v586
    %v723 = vunpack.c.l.b16 %v587
    %v724 = vunpack.c.l.b16 %v588
    %v725 = vunpack.c.l.b16 %v589
    %v726 = vpack.c.b16 %v711, %v710
    %v727 = vpack.c.b16 %v713, %v712
    %v728 = vpack.c.b16 %v715, %v714
    %v729 = vpack.c.b16 %v717, %v716
    %v730 = vpack.c.b16 %v719, %v718
    %v731 = vpack.c.b16 %v721, %v720
    %v732 = vpack.c.b16 %v723, %v722
    %v733 = vpack.c.b16 %v725, %v724
    %742 = vmatprep.subr.bf16.mxu0 0
    %743 = vmatpush1.bf16.msra.mxu0 %v597
    %744 = vmatprep.subr.bf16.mxu0 0
    %745 = vmatpush1.bf16.msra.mxu0 %v596
    %746 = vmatprep.subr.bf16.mxu0 0
    %747 = vmatpush1.bf16.msra.mxu0 %v595
    %748 = vmatprep.subr.bf16.mxu0 0
    %749 = vmatpush1.bf16.msra.mxu0 %v594
    %750 = vmatprep.subr.bf16.mxu0 0
    %751 = vmatpush1.bf16.msra.mxu0 %v593
    %752 = vmatprep.subr.bf16.mxu0 0
    %753 = vmatpush1.bf16.msra.mxu0 %v592
    %754 = vmatprep.subr.bf16.mxu0 0
    %755 = vmatpush1.bf16.msra.mxu0 %v591
    %756 = vmatprep.subr.bf16.mxu0 0
    %757 = vmatpush1.bf16.msra.mxu0 %v590
    %758 = vmatprep.subr.bf16.mxu0 0
    %759 = vmatpush2.bf16.msra.mxu0 0
    %760 = vmatprep.subr.bf16.mxu0 0
    %761 = vmatpush2.bf16.msra.mxu0 0
    %762 = vmatprep.subr.bf16.mxu0 0
    %763 = vmatpush2.bf16.msra.mxu0 0
    %764 = vmatprep.subr.bf16.mxu0 0
    %765 = vmatpush2.bf16.msra.mxu0 0
    %766 = vmatprep.subr.bf16.mxu0 0
    %767 = vmatpush2.bf16.msra.mxu0 0
    %768 = vmatprep.subr.bf16.mxu0 0
    %769 = vmatpush2.bf16.msra.mxu0 0
    %770 = vmatprep.subr.bf16.mxu0 0
    %771 = vmatpush2.bf16.msra.mxu0 0
    %772 = vmatprep.subr.bf16.mxu0 0
    %773 = vmatpush2.bf16.msra.mxu0 0
    %774 = vmatprep.mubr.bf16.mxu0 0
    %775 = vmatmul.mubr.bf16.gmra.mxu0 %v726
    %v776 = vpop.f32.mrf.mxu0
    %v777 = vadd.f32 %v617, %v776
    %v778 = vpop.f32.mrf.mxu0
    %v779 = vpop.f32.mrf.mxu0
    %v780 = vadd.f32 %v622, %v779
    %v781 = vpop.f32.mrf.mxu0
    %782 = vmatprep.mubr.bf16.mxu0 0
    %783 = vmatmul.mubr.bf16.gmra.mxu0 %v727
    %v784 = vpop.f32.mrf.mxu0
    %v785 = vadd.f32 %v627, %v784
    %v786 = vpop.f32.mrf.mxu0
    %v787 = vpop.f32.mrf.mxu0
    %v788 = vadd.f32 %v632, %v787
    %v789 = vpop.f32.mrf.mxu0
    %790 = vmatprep.mubr.bf16.mxu0 0
    %791 = vmatmul.mubr.bf16.gmra.mxu0 %v728
    %v792 = vpop.f32.mrf.mxu0
    %v793 = vadd.f32 %v637, %v792
    %v794 = vpop.f32.mrf.mxu0
    %v795 = vpop.f32.mrf.mxu0
    %v796 = vadd.f32 %v642, %v795
    %v797 = vpop.f32.mrf.mxu0
    %798 = vmatprep.mubr.bf16.mxu0 0
    %799 = vmatmul.mubr.bf16.gmra.mxu0 %v729
    %v800 = vpop.f32.mrf.mxu0
    %v801 = vadd.f32 %v647, %v800
    %v802 = vpop.f32.mrf.mxu0
    %v803 = vpop.f32.mrf.mxu0
    %v804 = vadd.f32 %v652, %v803
    %v805 = vpop.f32.mrf.mxu0
    %806 = vmatprep.mubr.bf16.mxu0 0
    %807 = vmatmul.mubr.bf16.gmra.mxu0 %v730
    %v808 = vpop.f32.mrf.mxu0
    %v809 = vadd.f32 %v657, %v808
    %v810 = vpop.f32.mrf.mxu0
    %v811 = vpop.f32.mrf.mxu0
    %v812 = vadd.f32 %v662, %v811
    %v813 = vpop.f32.mrf.mxu0
    %814 = vmatprep.mubr.bf16.mxu0 0
    %815 = vmatmul.mubr.bf16.gmra.mxu0 %v731
    %v816 = vpop.f32.mrf.mxu0
    %v817 = vadd.f32 %v667, %v816
    %v818 = vpop.f32.mrf.mxu0
    %v819 = vpop.f32.mrf.mxu0
    %v820 = vadd.f32 %v672, %v819
    %v821 = vpop.f32.mrf.mxu0
    %822 = vmatprep.mubr.bf16.mxu0 0
    %823 = vmatmul.mubr.bf16.gmra.mxu0 %v732
    %v824 = vpop.f32.mrf.mxu0
    %v825 = vadd.f32 %v677, %v824
    %v826 = vpop.f32.mrf.mxu0
    %v827 = vpop.f32.mrf.mxu0
    %v828 = vadd.f32 %v682, %v827
    %v829 = vpop.f32.mrf.mxu0
    %830 = vmatprep.mubr.bf16.mxu0 0
    %831 = vmatmul.mubr.bf16.gmra.mxu0 %v733
    %v832 = vpop.f32.mrf.mxu0
    %v833 = vadd.f32 %v687, %v832
    %v834 = vpop.f32.mrf.mxu0
    %v835 = vpop.f32.mrf.mxu0
    %v836 = vadd.f32 %v692, %v835
    %v837 = vpop.f32.mrf.mxu0
    %838 = vdwg.mxu0
    %v839 = vmax.f32 %v777, 0.0
    %v840 = vmax.f32 %v780, 0.0
    %v841 = vmax.f32 %v785, 0.0
    %v842 = vmax.f32 %v788, 0.0
    %v843 = vmax.f32 %v793, 0.0
    %v844 = vmax.f32 %v796, 0.0
    %v845 = vmax.f32 %v801, 0.0
    %v846 = vmax.f32 %v804, 0.0
    %v847 = vmax.f32 %v809, 0.0
    %v848 = vmax.f32 %v812, 0.0
    %v849 = vmax.f32 %v817, 0.0
    %v850 = vmax.f32 %v820, 0.0
    %v851 = vmax.f32 %v825, 0.0
    %v852 = vmax.f32 %v828, 0.0
    %v853 = vmax.f32 %v833, 0.0
    %v854 = vmax.f32 %v836, 0.0
    %v855 = vld [vmem:[%s5] sm:$0xff]
    %v856 = vld [vmem:[%s5 + $0x8] sm:$0xff]
    %v857 = vld [vmem:[%s5 + $0x10] sm:$0xff]
    %v858 = vld [vmem:[%s5 + $0x18] sm:$0xff]
    %v859 = vld [vmem:[%s5 + $0x20] sm:$0xff]
    %v860 = vld [vmem:[%s5 + $0x28] sm:$0xff]
    %v861 = vld [vmem:[%s5 + $0x30] sm:$0xff]
    %v862 = vld [vmem:[%s5 + $0x38] sm:$0xff]
    %v863 = vld [vmem:[%s5 + $0x40] sm:$0xff]
    %v864 = vld [vmem:[%s5 + $0x48] sm:$0xff]
    %v865 = vld [vmem:[%s5 + $0x50] sm:$0xff]
    %v866 = vld [vmem:[%s5 + $0x58] sm:$0xff]
    %v867 = vld [vmem:[%s5 + $0x60] sm:$0xff]
    %v868 = vld [vmem:[%s5 + $0x68] sm:$0xff]
    %v869 = vld [vmem:[%s5 + $0x70] sm:$0xff]
    %v870 = vld [vmem:[%s5 + $0x78] sm:$0xff]
    %872 = vset.pattern.permute.xlu0 0
    %873 = vperm.xlu0 %872, %v855
    %v874 = vpop.permute.xlu0 %873
    %877 = vset.pattern.permute.xlu0 0
    %878 = vperm.xlu0 %877, %v856
    %v879 = vpop.permute.xlu0 %878
    %882 = vset.pattern.permute.xlu0 0
    %883 = vperm.xlu0 %882, %v857
    %v884 = vpop.permute.xlu0 %883
    %887 = vset.pattern.permute.xlu0 0
    %888 = vperm.xlu0 %887, %v858
    %v889 = vpop.permute.xlu0 %888
    %892 = vset.pattern.permute.xlu0 0
    %893 = vperm.xlu0 %892, %v859
    %v894 = vpop.permute.xlu0 %893
    %897 = vset.pattern.permute.xlu0 0
    %898 = vperm.xlu0 %897, %v860
    %v899 = vpop.permute.xlu0 %898
    %902 = vset.pattern.permute.xlu0 0
    %903 = vperm.xlu0 %902, %v861
    %v904 = vpop.permute.xlu0 %903
    %907 = vset.pattern.permute.xlu0 0
    %908 = vperm.xlu0 %907, %v862
    %v909 = vpop.permute.xlu0 %908
    %912 = vset.pattern.permute.xlu0 0
    %913 = vperm.xlu0 %912, %v863
    %v914 = vpop.permute.xlu0 %913
    %917 = vset.pattern.permute.xlu0 0
    %918 = vperm.xlu0 %917, %v864
    %v919 = vpop.permute.xlu0 %918
    %922 = vset.pattern.permute.xlu0 0
    %923 = vperm.xlu0 %922, %v865
    %v924 = vpop.permute.xlu0 %923
    %927 = vset.pattern.permute.xlu0 0
    %928 = vperm.xlu0 %927, %v866
    %v929 = vpop.permute.xlu0 %928
    %932 = vset.pattern.permute.xlu0 0
    %933 = vperm.xlu0 %932, %v867
    %v934 = vpop.permute.xlu0 %933
    %937 = vset.pattern.permute.xlu0 0
    %938 = vperm.xlu0 %937, %v868
    %v939 = vpop.permute.xlu0 %938
    %942 = vset.pattern.permute.xlu0 0
    %943 = vperm.xlu0 %942, %v869
    %v944 = vpop.permute.xlu0 %943
    %947 = vset.pattern.permute.xlu0 0
    %948 = vperm.xlu0 %947, %v870
    %v949 = vpop.permute.xlu0 %948
    %v951 = vmul.f32 %v839, %v874
    %v952 = vmul.f32 %v840, %v879
    %v953 = vmul.f32 %v841, %v884
    %v954 = vmul.f32 %v842, %v889
    %v955 = vmul.f32 %v843, %v894
    %v956 = vmul.f32 %v844, %v899
    %v957 = vmul.f32 %v845, %v904
    %v958 = vmul.f32 %v846, %v909
    %v959 = vmul.f32 %v847, %v914
    %v960 = vmul.f32 %v848, %v919
    %v961 = vmul.f32 %v849, %v924
    %v962 = vmul.f32 %v850, %v929
    %v963 = vmul.f32 %v851, %v934
    %v964 = vmul.f32 %v852, %v939
    %v965 = vmul.f32 %v853, %v944
    %v966 = vmul.f32 %v854, %v949
    %v967 = vadd.f32 %v951, %v952
    %v968 = vadd.f32 %v967, %v953
    %v969 = vadd.f32 %v968, %v954
    %v970 = vadd.f32 %v969, %v955
    %v971 = vadd.f32 %v970, %v956
    %v972 = vadd.f32 %v971, %v957
    %v973 = vadd.f32 %v972, %v958
    %v974 = vadd.f32 %v973, %v959
    %v975 = vadd.f32 %v974, %v960
    %v976 = vadd.f32 %v975, %v961
    %v977 = vadd.f32 %v976, %v962
    %v978 = vadd.f32 %v977, %v963
    %v979 = vadd.f32 %v978, %v964
    %v980 = vadd.f32 %v979, %v965
    %v981 = vadd.f32 %v980, %v966
    %v982 = vrot.slane %v981, 4
    %v983 = vadd.f32 %v981, %v982
    %v984 = vrot.slane %v983, 2
    %v985 = vadd.f32 %v983, %v984
    %v986 = vrot.slane %v985, 1
    %v987 = vadd.f32 %v985, %v986
    %s988 = sld [smem:[#allocation2]]
    %v989 = vstv %s988
    %v990 = vadd.f32 %v987, %v989
    %991 = vst [vmem:[#allocation3] sm:$0x1] %v990
    // Predicated region
    $region30: #{tpu_custom_call.1} parent=1 // pred_check
      _
    $region31: #{tpu_custom_call.1} parent=1 // pred_check_branch
      %993 = sbr.rel (0) target = $region33
    $region32: #{tpu_custom_call.1} parent=1 // pred_region
      %s995 = ssub.s32 16, 16
      %996 = vsyncadd [#allocation4], %s995
      %s998 = sshll.u32 [#allocation3], 4
      %s999 = int_to_ptr.vmem [resolvable:$true] %s998
      %1001 = dma.vmem_to_hbm [thread:$0]  %s999, 16, %s7, [#allocation4]
    $region33: #{tpu_custom_call.1} parent=1 // pred_fallthru
      _
    // Predicated region
    $region34: #{tpu_custom_call.1} parent=1 // pred_check
      _
    $region35: #{tpu_custom_call.1} parent=1 // pred_check_branch
      %1003 = sbr.rel (0) target = $region37
    $region36: #{tpu_custom_call.1} parent=1 // pred_region
      %1004 = dma.done [#allocation4], 16
    $region37: #{tpu_custom_call.1} parent=1 // pred_fallthru
      _
    %1005 = vsyncpa [#allocation4], 1

</llo_original>
